<compile_context>
chip_gen: v7x
topology: tpu7x:2x2x1
jax: 0.10.0
libtpu: 0.0.40
codegen_flags: <defaults>
</compile_context>

<pallas_src>
import jax
import jax.numpy as jnp
from jax import lax
from jax.experimental import pallas as pl
from jax.experimental.pallas import tpu as pltpu

_LANES = 128
_SUBLANES = 8
_MAX_BLOCK_BYTES = 4 * 1024 * 1024   # per-input block budget (>= ~1 MiB HBM plateau)
_MAX_ROW_TILE = 64                   # keeps the (row_tile, 128) f32 loop carries small
_VMEM_LIMIT = 32 * 1024 * 1024       # 2 inputs x 2 bufs x <=4 MiB + tiny outputs << 32 MiB


def _cdiv(a, b):
    return -(-a // b)


def _round_up(a, b):
    return _cdiv(a, b) * b


def _make_dice_partial_kernel(d_valid, feat_tile, needs_mask):
    """Build the per-(row_tile, feat_tile) partial-sum kernel.

    Accumulates per-row partial sums of x*t and x+t into lane-dense
    (row_tile, 128) f32 accumulators resident in the output blocks.
    """
    n_chunks = feat_tile // _LANES
    unroll = min(8, n_chunks)

    def kernel(x_ref, t_ref, inter_ref, denom_ref):
        k = pl.program_id(1)                 # feature (reduction) axis, innermost
        row_tile = x_ref.shape[0]
        col_base = k * feat_tile             # global column offset of this block

        if needs_mask:
            lane_ids = lax.broadcasted_iota(jnp.int32, (row_tile, _LANES), 1)

        def chunk(c, carry):
            inter_acc, denom_acc = carry
            lo = pl.multiple_of(c * _LANES, _LANES)
            # Per-chunk load + upcast + math: intermediates stay in vregs,
            # never materialized as (row_tile, feat_tile) VMEM scratch.
            x = x_ref[:, pl.ds(lo, _LANES)].astype(jnp.float32)
            t = t_ref[:, pl.ds(lo, _LANES)].astype(jnp.float32)
            if needs_mask:
                valid = (lane_ids + (col_base + lo)) < d_valid
                x = jnp.where(valid, x, 0.0)
                t = jnp.where(valid, t, 0.0)
            return inter_acc + x * t, denom_acc + (x + t)

        zeros = jnp.zeros((row_tile, _LANES), jnp.float32)
        inter_part, denom_part = lax.fori_loop(
            0, n_chunks, chunk, (zeros, zeros), unroll=unroll)

        # Output blocks are resident across the feature axis: init on the first
        # feature tile, accumulate afterwards.  HBM writeback happens only when
        # the row-tile index changes.
        @pl.when(k == 0)
        def _():
            inter_ref[...] = inter_part
            denom_ref[...] = denom_part

        @pl.when(k > 0)
        def _():
            inter_ref[...] += inter_part
            denom_ref[...] += denom_part

    return kernel


def dice_loss(x, t):
    assert x.shape == t.shape and x.ndim == 2
    n, d = x.shape

    itemsize = max(jnp.dtype(x.dtype).itemsize, jnp.dtype(t.dtype).itemsize)
    pack = _SUBLANES * max(1, 4 // itemsize)   # packed sublane tile: 8 / 16 / 32 rows

    # Fold features into rows ((N, D) -> (N*g, D/g); a free row-major reshape,
    # exact for these sums) so small-N / large-D shapes expose >= 2 parallel
    # row tiles (v7x has 2 TensorCores sharing HBM bandwidth).
    g = 1
    while (n * g < 2 * pack and g < 64
           and d % (2 * g) == 0 and d // (2 * g) >= _LANES):
        g *= 2
    rows, d_f = n * g, d // g
    if g > 1:
        x = x.reshape(rows, d_f)
        t = t.reshape(rows, d_f)

    # Row tile: multiple of the packed sublane tile; split into >= 2 row tiles
    # whenever possible so the "parallel" grid axis is nontrivial.
    rows_padded = _round_up(rows, pack)
    if rows_padded >= 2 * pack:
        row_tile = min(_MAX_ROW_TILE, _round_up(rows_padded // 2, pack))
    else:
        row_tile = rows_padded

    # Feature tile: as large as the per-block byte budget allows (no static cap;
    # the in-kernel chunk loop is a fori_loop, not a static unroll).
    max_feat = max(_LANES,
                   (_MAX_BLOCK_BYTES // (row_tile * itemsize)) // _LANES * _LANES)
    feat_tile = min(_round_up(d_f, _LANES), max_feat)

    grid = (_cdiv(rows, row_tile), _cdiv(d_f, feat_tile))
    needs_mask = (d_f % feat_tile) != 0    # ragged feature tail masked in-kernel

    kernel = _make_dice_partial_kernel(d_f, feat_tile, needs_mask)

    inter_out, denom_out = pl.pallas_call(
        kernel,
        out_shape=(
            jax.ShapeDtypeStruct((rows, _LANES), jnp.float32),
            jax.ShapeDtypeStruct((rows, _LANES), jnp.float32),
        ),
        grid_spec=pltpu.PrefetchScalarGridSpec(
            num_scalar_prefetch=0,
            grid=grid,
            in_specs=[
                pl.BlockSpec((row_tile, feat_tile), lambda i, k: (i, k)),
                pl.BlockSpec((row_tile, feat_tile), lambda i, k: (i, k)),
            ],
            out_specs=[
                pl.BlockSpec((row_tile, _LANES), lambda i, k: (i, 0)),
                pl.BlockSpec((row_tile, _LANES), lambda i, k: (i, 0)),
            ],
        ),
        compiler_params=pltpu.CompilerParams(
            dimension_semantics=("parallel", "arbitrary"),
            vmem_limit_bytes=_VMEM_LIMIT,
        ),
    )(x, t)

    # ---- tiny epilogue on (N, g*128) partials -------------------------------
    smooth = 1e-05
    inter = jnp.sum(inter_out.reshape(n, g * _LANES), axis=1)
    denom = jnp.sum(denom_out.reshape(n, g * _LANES), axis=1)
    dice = (2.0 * inter + smooth) / (denom + smooth)
    return 1.0 - jnp.sum(dice) / n


def dice_loss_ref(x, t):
    smooth = 1e-05
    x = x.astype(jnp.float32)
    t = t.astype(jnp.float32)
    n = t.shape[0]
    intersection = x * t
    dice = (2.0 * intersection.sum(1) + smooth) / (x.sum(1) + t.sum(1) + smooth)
    return 1.0 - dice.sum() / n


if __name__ == "__main__":
    key = jax.random.PRNGKey(0)
    k1, k2, k3, k4, k5, k6 = jax.random.split(key, 6)

    # Case 1: aligned small shape, float32 (exercises the D->rows fold, 2 row tiles).
    N, D = 8, 256
    probs = jax.random.uniform(k1, (N, D), dtype=jnp.float32)
    target = (jax.random.uniform(k2, (N, D), dtype=jnp.float32) > 0.5).astype(jnp.float32)
    loss = dice_loss(probs, target)
    jax.block_until_ready(loss)
    ref = dice_loss_ref(probs, target)
    assert jnp.allclose(loss, ref, atol=1e-5, rtol=1e-5), (loss, ref)

    # Case 2: ragged shape (exercises the in-kernel tail mask, no jnp.pad), float32.
    N2, D2 = 6, 200
    probs2 = jax.random.uniform(k3, (N2, D2), dtype=jnp.float32)
    target2 = (jax.random.uniform(k4, (N2, D2), dtype=jnp.float32) > 0.5).astype(jnp.float32)
    loss2 = dice_loss(probs2, target2)
    jax.block_until_ready(loss2)
    ref2 = dice_loss_ref(probs2, target2)
    assert jnp.allclose(loss2, ref2, atol=1e-5, rtol=1e-5), (loss2, ref2)

    # Case 3: bf16 inputs streamed narrow (half the HBM bytes), f32 accumulation.
    probs3 = probs.astype(jnp.bfloat16)
    target3 = target.astype(jnp.bfloat16)
    loss3 = dice_loss(probs3, target3)
    jax.block_until_ready(loss3)
    ref3 = dice_loss_ref(probs3, target3)
    assert jnp.allclose(loss3, ref3, atol=1e-3, rtol=1e-3), (loss3, ref3)

    # Case 4: small-N, larger ragged D (fold g=4, multi-chunk fori loop + tail mask).
    N4, D4 = 4, 1000
    probs4 = jax.random.uniform(k5, (N4, D4), dtype=jnp.float32)
    target4 = (jax.random.uniform(k6, (N4, D4), dtype=jnp.float32) > 0.5).astype(jnp.float32)
    loss4 = dice_loss(probs4, target4)
    jax.block_until_ready(loss4)
    ref4 = dice_loss_ref(probs4, target4)
    assert jnp.allclose(loss4, ref4, atol=1e-5, rtol=1e-5), (loss4, ref4)

    print("KERNEL_OK")
</pallas_src>

<mosaic_0001>
module attributes {stable_mosaic.version = 11 : i64} {
  func.func @kernel(%arg0: i32, %arg1: i32, %arg2: memref<8x128xf32, #tpu.memory_space<vmem>>, %arg3: memref<8x128xf32, #tpu.memory_space<vmem>>, %arg4: memref<8x128xf32, #tpu.memory_space<vmem>>, %arg5: memref<8x128xf32, #tpu.memory_space<vmem>>) attributes {dimension_semantics = [#tpu.dimension_semantics<parallel>, #tpu.dimension_semantics<arbitrary>], iteration_bounds = array<i64: 2, 1>, scalar_prefetch = 0 : i64, scratch_operands = 0 : i64, tpu.core_type = #tpu.core_type<tc>, window_params = [{transform_indices = @transform_0, window_bounds = array<i64: 8, 128>}, {transform_indices = @transform_1, window_bounds = array<i64: 8, 128>}, {transform_indices = @transform_2, window_bounds = array<i64: 8, 128>}, {transform_indices = @transform_3, window_bounds = array<i64: 8, 128>}]} {
    %cst = arith.constant 0.000000e+00 : f32
    %0 = vector.broadcast %cst : f32 to vector<8x128xf32>
    %c0_i32 = arith.constant 0 : i32
    %c128_i32 = arith.constant 128 : i32
    %1 = arith.muli %c0_i32, %c128_i32 : i32
    %2 = tpu.assume_multiple %1, 128 : i32
    %c0 = arith.constant 0 : index
    %3 = arith.index_cast %2 : i32 to index
    %4 = vector.load %arg2[%c0, %3] : memref<8x128xf32, #tpu.memory_space<vmem>>, vector<8x128xf32>
    %c0_0 = arith.constant 0 : index
    %5 = arith.index_cast %2 : i32 to index
    %6 = vector.load %arg3[%c0_0, %5] : memref<8x128xf32, #tpu.memory_space<vmem>>, vector<8x128xf32>
    %7 = arith.mulf %4, %6 : vector<8x128xf32>
    %8 = arith.addf %0, %7 : vector<8x128xf32>
    %9 = arith.addf %4, %6 : vector<8x128xf32>
    %10 = arith.addf %0, %9 : vector<8x128xf32>
    %c1_i32 = arith.constant 1 : i32
    %c0_i32_1 = arith.constant 0 : i32
    %11 = arith.cmpi eq, %arg1, %c0_i32_1 : i32
    %12 = arith.extui %11 : i1 to i32
    %c0_i32_2 = arith.constant 0 : i32
    %13 = arith.cmpi ne, %12, %c0_i32_2 : i32
    scf.if %13 {
      %c0_5 = arith.constant 0 : index
      %c0_6 = arith.constant 0 : index
      %17 = vector.load %arg4[%c0_5, %c0_6] : memref<8x128xf32, #tpu.memory_space<vmem>>, vector<8x128xf32>
      tpu.vector_store %arg4[%c0_5, %c0_6], %8 {strides = array<i32>} : memref<8x128xf32, #tpu.memory_space<vmem>>, vector<8x128xf32>,
      %c0_7 = arith.constant 0 : index
      %c0_8 = arith.constant 0 : index
      %18 = vector.load %arg5[%c0_7, %c0_8] : memref<8x128xf32, #tpu.memory_space<vmem>>, vector<8x128xf32>
      tpu.vector_store %arg5[%c0_7, %c0_8], %10 {strides = array<i32>} : memref<8x128xf32, #tpu.memory_space<vmem>>, vector<8x128xf32>,
    } else {
    }
    %c0_i32_3 = arith.constant 0 : i32
    %14 = arith.cmpi sgt, %arg1, %c0_i32_3 : i32
    %15 = arith.extui %14 : i1 to i32
    %c0_i32_4 = arith.constant 0 : i32
    %16 = arith.cmpi ne, %15, %c0_i32_4 : i32
    scf.if %16 {
      %c0_5 = arith.constant 0 : index
      %c0_6 = arith.constant 0 : index
      %17 = vector.load %arg4[%c0_5, %c0_6] : memref<8x128xf32, #tpu.memory_space<vmem>>, vector<8x128xf32>
      %18 = arith.addf %17, %8 : vector<8x128xf32>
      %c0_7 = arith.constant 0 : index
      %c0_8 = arith.constant 0 : index
      %19 = vector.load %arg4[%c0_7, %c0_8] : memref<8x128xf32, #tpu.memory_space<vmem>>, vector<8x128xf32>
      tpu.vector_store %arg4[%c0_7, %c0_8], %18 {strides = array<i32>} : memref<8x128xf32, #tpu.memory_space<vmem>>, vector<8x128xf32>,
      %c0_9 = arith.constant 0 : index
      %c0_10 = arith.constant 0 : index
      %20 = vector.load %arg5[%c0_9, %c0_10] : memref<8x128xf32, #tpu.memory_space<vmem>>, vector<8x128xf32>
      %21 = arith.addf %20, %10 : vector<8x128xf32>
      %c0_11 = arith.constant 0 : index
      %c0_12 = arith.constant 0 : index
      %22 = vector.load %arg5[%c0_11, %c0_12] : memref<8x128xf32, #tpu.memory_space<vmem>>, vector<8x128xf32>
      tpu.vector_store %arg5[%c0_11, %c0_12], %21 {strides = array<i32>} : memref<8x128xf32, #tpu.memory_space<vmem>>, vector<8x128xf32>,
    } else {
    }
    return
  }
  func.func @transform_0(%arg0: i32, %arg1: i32) -> (i32, i32) {
    %c0_i32 = arith.constant 0 : i32
    return %arg0, %arg1 : i32, i32
  }
  func.func @transform_1(%arg0: i32, %arg1: i32) -> (i32, i32) {
    %c0_i32 = arith.constant 0 : i32
    return %arg0, %arg1 : i32, i32
  }
  func.func @transform_2(%arg0: i32, %arg1: i32) -> (i32, i32) {
    %c0_i32 = arith.constant 0 : i32
    %c0_i32_0 = arith.constant 0 : i32
    return %arg0, %c0_i32 : i32, i32
  }
  func.func @transform_3(%arg0: i32, %arg1: i32) -> (i32, i32) {
    %c0_i32 = arith.constant 0 : i32
    %c0_i32_0 = arith.constant 0 : i32
    return %arg0, %c0_i32 : i32, i32
  }
}

</mosaic_0001>

<llo_original>
// kernel: tpu_custom_call.1
$region0: #{tpu_custom_call.1}
  #allocation0 [shape = 'u32[]', space=smem, size = 0x4, offset = 0x4, fixed_abs, tag = 'smem constant byte address 0x4 - core index']
  #allocation1 [shape = 'u32[144,128]{1,0:T(1,128)}', space=vmem, size = 0x12000, scoped, tag = 'internal scratch']
  %s0 = inlined_call_operand.hbm [shape: f32[16,128], index: 0, kind: input, shape index: {}]
  %s1 = inlined_call_operand.hbm [shape: f32[16,128], index: 1, kind: input, shape index: {}]
  %s2 = inlined_call_operand.hbm [shape: f32[16,128], index: 2, kind: output, shape index: {0}]
  %s3 = inlined_call_operand.hbm [shape: f32[16,128], index: 3, kind: output, shape index: {1}]
  %4 = xla_tuple %s2, %s3
  %s5 = sld [smem:[#allocation0]]
  $region65: #{tpu_custom_call.1} parent=0
    _
  %s7 = ssub.s32 1, %s5
  %s8 = scalar_select 0, %s7, %s5
  $region1: #{tpu_custom_call.1} parent=0
    #allocation2 [shape = 'u8[8192]{0}', space=vmem, size = 0x2000, scoped, tag = 'input window, operand 0']
    #allocation3 [shape = 's32[2]{0}', space=sflag, size = 0x8, scoped, tag = 'scoped memory for tpu_custom_call.1']
    #allocation4 [shape = 's32[2]{0}', space=sflag, size = 0x8, scoped, tag = 'scoped memory for tpu_custom_call.1']
    #allocation5 [shape = 'u8[8192]{0}', space=vmem, size = 0x2000, scoped, tag = 'input window, operand 1']
    #allocation6 [shape = 's32[2]{0}', space=sflag, size = 0x8, scoped, tag = 'scoped memory for tpu_custom_call.1']
    #allocation7 [shape = 'u8[8192]{0}', space=vmem, size = 0x2000, scoped, tag = 'output window, operand 0']
    #allocation8 [shape = 'u8[8192]{0}', space=vmem, size = 0x2000, scoped, tag = 'output window, operand 1']
    #allocation9 [shape = 's32[2]{0}', space=sflag, size = 0x8, scoped, tag = 'scoped memory for tpu_custom_call.1']
    %9 = vsyncpa [#allocation3], 0
    %s10 = scalar_lea.sflag [#allocation3], 1
    %11 = vsyncpa %s10, 0
    %12 = vsyncpa [#allocation6], 0
    %s13 = scalar_lea.sflag [#allocation6], 1
    %14 = vsyncpa %s13, 0
    %15 = vsyncpa [#allocation4], 0
    %s16 = scalar_lea.sflag [#allocation4], 1
    %17 = vsyncpa %s16, 0
    %18 = vsyncpa [#allocation9], 0
    %s19 = scalar_lea.sflag [#allocation9], 1
    %20 = vsyncpa %s19, 0
    loop: start=0, step=1, limit=4
    $region2: #{tpu_custom_call.1} parent=1 // loop_pre_header
      _
    $region3: #{tpu_custom_call.1} parent=1 // loop_header
      %s22 = sphi 0, %s26
      %p23 = scmp.ge.s32.totalorder %s22, 4
      %s29 = sphi 0, %s41
      %s30 = sphi 0, %s37
      %s31 = sphi 0, %s29
      %s32 = sphi 0, %s30
      %s33 = sphi 0, %s31
      %s34 = sphi 0, %s32
      %s46 = sphi 0, %s48
      %s49 = sphi 0, %s46
      %s50 = sphi 0, %s49
      %s66 = sphi 0, %s50
      %s74 = sphi 0, %s76
      %s77 = sphi 0, %s74
      %s78 = sphi 0, %s77
      %s94 = sphi 0, %s78
      %s100 = sphi 0, %s102
      %s103 = sphi 0, %s100
      %s104 = sphi 0, %s103
      %s120 = sphi 0, %s104
      %s126 = sphi 0, %s128
      %s129 = sphi 0, %s126
      %s130 = sphi 0, %s129
      %s146 = sphi 0, %s130
    $region4: #{tpu_custom_call.1} parent=1 // loop_header_branch
      %25 = sbr.rel (%p23) target = $region8
    $region5: #{tpu_custom_call.1} parent=1 // loop_body
      %s27 = ssub.s32 %s22, 1
      %s28 = ssub.s32 %s22, 2
      %s35 = sadd.s32 1, %s30
      %p36 = scmp.ge.s32.totalorder %s35, 1
      %s37 = scalar_select %p36, 0, %s35
      %s38 = sadd.s32 1, %s29
      %s39 = scalar_select %p36, %s38, %s29
      %p40 = scmp.ge.s32.totalorder %s39, 2
      %s41 = scalar_select %p40, 0, %s39
      %s42 = ssub.s32 %s29, %s41
      %s43 = ssub.s32 %s30, %s37
      %s44 = sor.u32 %s42, %s43
      %p45 = scmp.eq.s32.totalorder %s44, 0
      %s47 = sadd.s32 %s46, 1
      %s48 = scalar_select %p45, %s46, %s47
      %p51 = pneg %p45
      %p52 = scmp.eq.s32.totalorder %s22, 1
      %p53 = por %p51, %p52
      %p54 = scmp.ne.s32.totalorder %s46, %s49
      %p55 = scmp.eq.s32.totalorder %s22, 0
      %p56 = por %p54, %p55
      %p57 = scmp.ne.s32.totalorder %s46, %s49
      %p58 = scmp.eq.s32.totalorder %s27, 1
      %p59 = por %p57, %p58
      %p60 = scmp.ne.s32.totalorder %s49, %s50
      %p61 = scmp.eq.s32.totalorder %s27, 0
      %p62 = por %p60, %p61
      %p63 = scmp.ne.s32.totalorder %s49, %s50
      %p64 = scmp.eq.s32.totalorder %s28, 1
      %p65 = por %p63, %p64
      %p67 = scmp.ne.s32.totalorder %s50, %s66
      %p68 = scmp.eq.s32.totalorder %s28, 0
      %p69 = por %p67, %p68
      %s70 = ssub.s32 %s29, %s41
      %s71 = ssub.s32 %s30, %s37
      %s72 = sor.u32 %s70, %s71
      %p73 = scmp.eq.s32.totalorder %s72, 0
      %s75 = sadd.s32 %s74, 1
      %s76 = scalar_select %p73, %s74, %s75
      %p79 = pneg %p73
      %p80 = scmp.eq.s32.totalorder %s22, 1
      %p81 = por %p79, %p80
      %p82 = scmp.ne.s32.totalorder %s74, %s77
      %p83 = scmp.eq.s32.totalorder %s22, 0
      %p84 = por %p82, %p83
      %p85 = scmp.ne.s32.totalorder %s74, %s77
      %p86 = scmp.eq.s32.totalorder %s27, 1
      %p87 = por %p85, %p86
      %p88 = scmp.ne.s32.totalorder %s77, %s78
      %p89 = scmp.eq.s32.totalorder %s27, 0
      %p90 = por %p88, %p89
      %p91 = scmp.ne.s32.totalorder %s77, %s78
      %p92 = scmp.eq.s32.totalorder %s28, 1
      %p93 = por %p91, %p92
      %p95 = scmp.ne.s32.totalorder %s78, %s94
      %p96 = scmp.eq.s32.totalorder %s28, 0
      %p97 = por %p95, %p96
      %s98 = ssub.s32 %s29, %s41
      %p99 = scmp.eq.s32.totalorder %s98, 0
      %s101 = sadd.s32 %s100, 1
      %s102 = scalar_select %p99, %s100, %s101
      %p105 = pneg %p99
      %p106 = scmp.eq.s32.totalorder %s22, 1
      %p107 = por %p105, %p106
      %p108 = scmp.ne.s32.totalorder %s100, %s103
      %p109 = scmp.eq.s32.totalorder %s22, 0
      %p110 = por %p108, %p109
      %p111 = scmp.ne.s32.totalorder %s100, %s103
      %p112 = scmp.eq.s32.totalorder %s27, 1
      %p113 = por %p111, %p112
      %p114 = scmp.ne.s32.totalorder %s103, %s104
      %p115 = scmp.eq.s32.totalorder %s27, 0
      %p116 = por %p114, %p115
      %p117 = scmp.ne.s32.totalorder %s103, %s104
      %p118 = scmp.eq.s32.totalorder %s28, 1
      %p119 = por %p117, %p118
      %p121 = scmp.ne.s32.totalorder %s104, %s120
      %p122 = scmp.eq.s32.totalorder %s28, 0
      %p123 = por %p121, %p122
      %s124 = ssub.s32 %s29, %s41
      %p125 = scmp.eq.s32.totalorder %s124, 0
      %s127 = sadd.s32 %s126, 1
      %s128 = scalar_select %p125, %s126, %s127
      %p131 = pneg %p125
      %p132 = scmp.eq.s32.totalorder %s22, 1
      %p133 = por %p131, %p132
      %p134 = scmp.ne.s32.totalorder %s126, %s129
      %p135 = scmp.eq.s32.totalorder %s22, 0
      %p136 = por %p134, %p135
      %p137 = scmp.ne.s32.totalorder %s126, %s129
      %p138 = scmp.eq.s32.totalorder %s27, 1
      %p139 = por %p137, %p138
      %p140 = scmp.ne.s32.totalorder %s129, %s130
      %p141 = scmp.eq.s32.totalorder %s27, 0
      %p142 = por %p140, %p141
      %p143 = scmp.ne.s32.totalorder %s129, %s130
      %p144 = scmp.eq.s32.totalorder %s28, 1
      %p145 = por %p143, %p144
      %p147 = scmp.ne.s32.totalorder %s130, %s146
      %p148 = scmp.eq.s32.totalorder %s28, 0
      %p149 = por %p147, %p148
      %p150 = scmp.le.s32.totalorder 1, %s22
      %p151 = scmp.lt.s32.totalorder %s22, 3
      %p152 = pnand %p150, %p151
      %p153 = pneg %p152
      // Predicated region
      $region9: #{tpu_custom_call.1} parent=5 // pred_check
        _
      $region10: #{tpu_custom_call.1} parent=5 // pred_check_branch
        %155 = sbr.rel (%p152) target = $region12
      $region11: #{tpu_custom_call.1} parent=5 // pred_region
        %s156 = ssub.s32 %s22, 1
      $region12: #{tpu_custom_call.1} parent=5 // pred_fallthru
        _
      %p157 = scmp.lt.s32.totalorder %s22, 2
      // Predicated region
      $region13: #{tpu_custom_call.1} parent=5 // pred_check
        %p158 = pneg %p157
      $region14: #{tpu_custom_call.1} parent=5 // pred_check_branch
        %160 = sbr.rel (%p158) target = $region16
      $region15: #{tpu_custom_call.1} parent=5 // pred_region
        // Predicated region
        $region17: #{tpu_custom_call.1} parent=15 // pred_check
          %p161 = pneg %p56
        $region18: #{tpu_custom_call.1} parent=15 // pred_check_branch
          %163 = sbr.rel (%p161) target = $region20
        $region19: #{tpu_custom_call.1} parent=15 // pred_region
          %s164 = sand.u32 %s46, 1
          %s165 = scalar_lea.sflag [#allocation3], %s164
          %s166 = sand.u32 %s46, 1
          %s167 = smul.addr %s166, 8
          %s168 = scalar_lea.vmem [#allocation2], %s167
          %s170 = ssub.s32 128, 128
          %171 = vsyncadd %s165, %s170
          %s172 = sadd.s32 %s30, %s29
          %s173 = smul.addr %s172, 128
          %s174 = scalar_lea.hbm %s0, %s173
          %s176 = sshll.u32 %s168, 4
          %s177 = int_to_ptr.vmem [resolvable:$true] %s176
          %179 = dma.hbm_to_vmem [thread:$0]  %s174, 128, %s177, %s165
        $region20: #{tpu_custom_call.1} parent=15 // pred_fallthru
          _
        // Predicated region
        $region21: #{tpu_custom_call.1} parent=15 // pred_check
          %p180 = pneg %p84
        $region22: #{tpu_custom_call.1} parent=15 // pred_check_branch
          %182 = sbr.rel (%p180) target = $region24
        $region23: #{tpu_custom_call.1} parent=15 // pred_region
          %s183 = sand.u32 %s74, 1
          %s184 = scalar_lea.sflag [#allocation6], %s183
          %s185 = sand.u32 %s74, 1
          %s186 = smul.addr %s185, 8
          %s187 = scalar_lea.vmem [#allocation5], %s186
          %s189 = ssub.s32 128, 128
          %190 = vsyncadd %s184, %s189
          %s191 = sadd.s32 %s30, %s29
          %s192 = smul.addr %s191, 128
          %s193 = scalar_lea.hbm %s1, %s192
          %s195 = sshll.u32 %s187, 4
          %s196 = int_to_ptr.vmem [resolvable:$true] %s195
          %198 = dma.hbm_to_vmem [thread:$0]  %s193, 128, %s196, %s184
        $region24: #{tpu_custom_call.1} parent=15 // pred_fallthru
          _
      $region16: #{tpu_custom_call.1} parent=5 // pred_fallthru
        _
      %p199 = scmp.le.s32.totalorder 1, %s22
      %p200 = scmp.lt.s32.totalorder %s22, 3
      %p201 = pnand %p199, %p200
      %p202 = pneg %p201
      // Predicated region
      $region25: #{tpu_custom_call.1} parent=5 // pred_check
        _
      $region26: #{tpu_custom_call.1} parent=5 // pred_check_branch
        %204 = sbr.rel (%p201) target = $region28
      $region27: #{tpu_custom_call.1} parent=5 // pred_region
        %s205 = ssub.s32 %s22, 1
        %s206 = sand.u32 %s49, 1
        %s207 = scalar_lea.sflag [#allocation3], %s206
        %s208 = sand.u32 %s49, 1
        %s209 = smul.addr %s208, 8
        %s210 = scalar_lea.vmem [#allocation2], %s209
        // Predicated region
        $region29: #{tpu_custom_call.1} parent=27 // pred_check
          %p211 = pneg %p62
        $region30: #{tpu_custom_call.1} parent=27 // pred_check_branch
          %213 = sbr.rel (%p211) target = $region32
        $region31: #{tpu_custom_call.1} parent=27 // pred_region
          %214 = dma.done %s207, 128
        $region32: #{tpu_custom_call.1} parent=27 // pred_fallthru
          _
        %s215 = sand.u32 %s77, 1
        %s216 = scalar_lea.sflag [#allocation6], %s215
        %s217 = sand.u32 %s77, 1
        %s218 = smul.addr %s217, 8
        %s219 = scalar_lea.vmem [#allocation5], %s218
        // Predicated region
        $region33: #{tpu_custom_call.1} parent=27 // pred_check
          %p220 = pneg %p90
        $region34: #{tpu_custom_call.1} parent=27 // pred_check_branch
          %222 = sbr.rel (%p220) target = $region36
        $region35: #{tpu_custom_call.1} parent=27 // pred_region
          %223 = dma.done %s216, 128
        $region36: #{tpu_custom_call.1} parent=27 // pred_fallthru
          _
        %s224 = sand.u32 %s49, 1
        %s225 = scalar_lea.sflag [#allocation3], %s224
        %s226 = sand.u32 %s49, 1
        %s227 = smul.addr %s226, 8
        %s228 = scalar_lea.vmem [#allocation2], %s227
        %p229 = pneg %p62
        %p230 = pneg %p59
        %s231 = sand.u32 %s77, 1
        %s232 = scalar_lea.sflag [#allocation6], %s231
        %s233 = sand.u32 %s77, 1
        %s234 = smul.addr %s233, 8
        %s235 = scalar_lea.vmem [#allocation5], %s234
        %p236 = pneg %p90
        %p237 = pneg %p87
        %p238 = pneg %p116
        %p239 = pneg %p113
        %s240 = sand.u32 %s103, 1
        %s241 = scalar_lea.sflag [#allocation4], %s240
        %s242 = sand.u32 %s103, 1
        %s243 = smul.addr %s242, 8
        %s244 = scalar_lea.vmem [#allocation7], %s243
        %p245 = pneg %p142
        %p246 = pneg %p139
        %s247 = sand.u32 %s129, 1
        %s248 = scalar_lea.sflag [#allocation9], %s247
        %s249 = sand.u32 %s129, 1
        %s250 = smul.addr %s249, 8
        %s251 = scalar_lea.vmem [#allocation8], %s250
        %v252 = vld [vmem:[%s210] sm:$0xff]
        %v253 = vld [vmem:[%s219] sm:$0xff]
        %v254 = vmul.f32 %v252, %v253
        %v255 = vadd.f32 %v254, 0.0
        %v256 = vadd.f32 %v252, %v253
        %v257 = vadd.f32 %v256, 0.0
        %p258 = scmp.eq.s32.totalorder %s32, 0
        // Predicated region
        $region37: #{tpu_custom_call.1} parent=27 // pred_check
          %p259 = pneg %p258
        $region38: #{tpu_custom_call.1} parent=27 // pred_check_branch
          %261 = sbr.rel (%p259) target = $region40
        $region39: #{tpu_custom_call.1} parent=27 // pred_region
          %262 = vst [vmem:[%s244] sm:$0xff] %v255
          %263 = vst [vmem:[%s251] sm:$0xff] %v257
        $region40: #{tpu_custom_call.1} parent=27 // pred_fallthru
          _
        %p264 = scmp.gt.s32.totalorder %s32, 0
        // Predicated region
        $region41: #{tpu_custom_call.1} parent=27 // pred_check
          %p265 = pneg %p264
        $region42: #{tpu_custom_call.1} parent=27 // pred_check_branch
          %267 = sbr.rel (%p265) target = $region44
        $region43: #{tpu_custom_call.1} parent=27 // pred_region
          %v268 = vld [vmem:[%s244] sm:$0xff]
          %v269 = vadd.f32 %v268, %v255
          %270 = vst [vmem:[%s244] sm:$0xff] %v269
          %v271 = vld [vmem:[%s251] sm:$0xff]
          %v272 = vadd.f32 %v271, %v257
          %273 = vst [vmem:[%s251] sm:$0xff] %v272
        $region44: #{tpu_custom_call.1} parent=27 // pred_fallthru
          _
        %s274 = sand.u32 %s103, 1
        %s275 = scalar_lea.sflag [#allocation4], %s274
        %s276 = sand.u32 %s103, 1
        %s277 = smul.addr %s276, 8
        %s278 = scalar_lea.vmem [#allocation7], %s277
        %s279 = sand.u32 %s129, 1
        %s280 = scalar_lea.sflag [#allocation9], %s279
        %s281 = sand.u32 %s129, 1
        %s282 = smul.addr %s281, 8
        %s283 = scalar_lea.vmem [#allocation8], %s282
        // Predicated region
        $region45: #{tpu_custom_call.1} parent=27 // pred_check
          %p284 = pneg %p113
        $region46: #{tpu_custom_call.1} parent=27 // pred_check_branch
          %286 = sbr.rel (%p284) target = $region48
        $region47: #{tpu_custom_call.1} parent=27 // pred_region
          %s288 = ssub.s32 128, 128
          %289 = vsyncadd %s275, %s288
          %s290 = smul.addr %s31, 128
          %s291 = scalar_lea.hbm %s2, %s290
          %s293 = sshll.u32 %s278, 4
          %s294 = int_to_ptr.vmem [resolvable:$true] %s293
          %296 = dma.vmem_to_hbm [thread:$0]  %s294, 128, %s291, %s275
        $region48: #{tpu_custom_call.1} parent=27 // pred_fallthru
          _
        // Predicated region
        $region49: #{tpu_custom_call.1} parent=27 // pred_check
          %p297 = pneg %p139
        $region50: #{tpu_custom_call.1} parent=27 // pred_check_branch
          %299 = sbr.rel (%p297) target = $region52
        $region51: #{tpu_custom_call.1} parent=27 // pred_region
          %s301 = ssub.s32 128, 128
          %302 = vsyncadd %s280, %s301
          %s303 = smul.addr %s31, 128
          %s304 = scalar_lea.hbm %s3, %s303
          %s306 = sshll.u32 %s283, 4
          %s307 = int_to_ptr.vmem [resolvable:$true] %s306
          %309 = dma.vmem_to_hbm [thread:$0]  %s307, 128, %s304, %s280
        $region52: #{tpu_custom_call.1} parent=27 // pred_fallthru
          _
      $region28: #{tpu_custom_call.1} parent=5 // pred_fallthru
        _
      %p310 = scmp.le.s32.totalorder 2, %s22
      // Predicated region
      $region53: #{tpu_custom_call.1} parent=5 // pred_check
        %p311 = pneg %p310
      $region54: #{tpu_custom_call.1} parent=5 // pred_check_branch
        %313 = sbr.rel (%p311) target = $region56
      $region55: #{tpu_custom_call.1} parent=5 // pred_region
        %s314 = ssub.s32 %s22, 2
        // Predicated region
        $region57: #{tpu_custom_call.1} parent=55 // pred_check
          %p315 = pneg %p119
        $region58: #{tpu_custom_call.1} parent=55 // pred_check_branch
          %317 = sbr.rel (%p315) target = $region60
        $region59: #{tpu_custom_call.1} parent=55 // pred_region
          %s318 = sand.u32 %s104, 1
          %s319 = scalar_lea.sflag [#allocation4], %s318
          %s320 = sand.u32 %s104, 1
          %s321 = smul.addr %s320, 8
          %s322 = scalar_lea.vmem [#allocation7], %s321
          %323 = dma.done %s319, 128
        $region60: #{tpu_custom_call.1} parent=55 // pred_fallthru
          _
        // Predicated region
        $region61: #{tpu_custom_call.1} parent=55 // pred_check
          %p324 = pneg %p145
        $region62: #{tpu_custom_call.1} parent=55 // pred_check_branch
          %326 = sbr.rel (%p324) target = $region64
        $region63: #{tpu_custom_call.1} parent=55 // pred_region
          %s327 = sand.u32 %s130, 1
          %s328 = scalar_lea.sflag [#allocation9], %s327
          %s329 = sand.u32 %s130, 1
          %s330 = smul.addr %s329, 8
          %s331 = scalar_lea.vmem [#allocation8], %s330
          %332 = dma.done %s328, 128
        $region64: #{tpu_custom_call.1} parent=55 // pred_fallthru
          _
      $region56: #{tpu_custom_call.1} parent=5 // pred_fallthru
        _
    $region6: #{tpu_custom_call.1} parent=1 // loop_footer
      %s26 = sadd.s32 1, %s22
    $region7: #{tpu_custom_call.1} parent=1 // loop_footer_branch
      %21 = sbr.rel target = $region3
    $region8: #{tpu_custom_call.1} parent=1 // loop_exit
      _
    %333 = vsyncpa [#allocation3], 1
    %s334 = scalar_lea.sflag [#allocation3], 1
    %335 = vsyncpa %s334, 1
    %336 = vsyncpa [#allocation6], 1
    %s337 = scalar_lea.sflag [#allocation6], 1
    %338 = vsyncpa %s337, 1
    %339 = vsyncpa [#allocation4], 1
    %s340 = scalar_lea.sflag [#allocation4], 1
    %341 = vsyncpa %s340, 1
    %342 = vsyncpa [#allocation9], 1
    %s343 = scalar_lea.sflag [#allocation9], 1
    %344 = vsyncpa %s343, 1

</llo_original>
